<compile_context>
chip_gen: v6e
topology: v6e:2x2x1
jax: 0.10.0
libtpu: 0.0.40
codegen_flags: <defaults>
</compile_context>

<pallas_src>
import jax
import jax.numpy as jnp
from jax.experimental import pallas as pl
from jax.experimental.pallas import tpu as pltpu

_MiB = 1024 * 1024


def _mish_kernel(x_ref, o_ref):
    # Upcast to f32 for accurate/fast transcendentals, cast back on store.
    # Exact identity (not an approximation), with e = exp(x):
    #   tanh(softplus(x)) = ((1+e)^2 - 1) / ((1+e)^2 + 1)
    #                     = (e^2 + 2e) / (e^2 + 2e + 2)
    # Clamp x before exp so e^2 cannot overflow; for x >= 20 the ratio is
    # already 1.0 in f32, so clamping is lossless. This uses 1 exp + 1
    # reciprocal on the EUP (vs exp + log1p + tanh in the naive form).
    x = x_ref[...].astype(jnp.float32)
    e = jnp.exp(jnp.minimum(x, 20.0))
    n = e * (e + 2.0)
    t = n / (n + 2.0)  # exact division (recip + cheap VPU refinement)
    o_ref[...] = (x * t).astype(o_ref.dtype)


def _vmem_budget_bytes() -> int:
    try:
        phys = int(pltpu.get_tpu_info().vmem_capacity_bytes)
    except Exception:
        phys = 128 * _MiB  # v5e/v6e physical; v7x has 64 MiB
    # Use at most half of physical VMEM, capped at 64 MiB, so v7x (64 MiB
    # physical) gets 32 MiB and v5e/v6e get 64 MiB scoped limit.
    return int(min(phys // 2, 64 * _MiB))


def _to_lane_dense_2d(x):
    """Reshape to (rows, L) with L a multiple of 128 when possible, avoiding
    any full-tensor pad/copy in the common cases. Returns (x2d, tail_pad)."""
    n = x.size
    if x.ndim >= 2 and x.shape[-1] % 128 == 0:
        return x.reshape(-1, x.shape[-1]), 0
    flat = x.reshape(-1)
    for lane in (4096, 2048, 1024, 512, 256, 128):
        if n % lane == 0:
            return flat.reshape(n // lane, lane), 0
    # Rare fallback: pad the flat tail to a multiple of 128 (one extra copy).
    lane = 128
    pad = (-n) % lane
    flat = jnp.pad(flat, (0, pad))
    return flat.reshape((n + pad) // lane, lane), pad


def _pick_tile_rows(rows: int, lane: int, itemsize: int, vmem_budget: int) -> int:
    bytes_per_row = lane * itemsize
    # Double-buffered input + output blocks => ~4x tile bytes resident;
    # keep ~20% headroom -> tile_bytes <= budget / 5.
    budget_rows = max(8, vmem_budget // (5 * bytes_per_row))
    budget_rows = (budget_rows // 8) * 8
    # Keep >= ~4 grid steps on larger inputs so both TensorCores on v7x get
    # work from the "parallel" axis.
    if rows >= 32:
        cap = max(8, ((-(-rows // 4)) // 8) * 8)
        budget_rows = min(budget_rows, cap)
    tile = min(budget_rows, rows)
    if tile < rows:
        # Block second-to-last dim must be a multiple of 8 (or full extent).
        tile = max(8, (tile // 8) * 8)
    return tile


def mish(x: jax.Array) -> jax.Array:
    """Elementwise Mish via a Pallas TPU kernel. Works for any shape/dtype."""
    orig_shape = x.shape
    orig_dtype = x.dtype
    n = x.size
    if n == 0:
        return x

    x2, pad = _to_lane_dense_2d(x)
    rows, lane = x2.shape

    vmem_budget = _vmem_budget_bytes()
    tile_rows = _pick_tile_rows(rows, lane, x2.dtype.itemsize, vmem_budget)
    grid = (pl.cdiv(rows, tile_rows),)

    out2 = pl.pallas_call(
        _mish_kernel,
        out_shape=jax.ShapeDtypeStruct((rows, lane), orig_dtype),
        grid_spec=pltpu.PrefetchScalarGridSpec(
            num_scalar_prefetch=0,
            grid=grid,
            in_specs=[pl.BlockSpec((tile_rows, lane), lambda i: (i, 0))],
            out_specs=pl.BlockSpec((tile_rows, lane), lambda i: (i, 0)),
        ),
        compiler_params=pltpu.CompilerParams(
            dimension_semantics=("parallel",),
            vmem_limit_bytes=vmem_budget,
        ),
    )(x2)

    if pad:
        out2 = out2.reshape(-1)[:n]
    return out2.reshape(orig_shape)


def _mish_ref(x):
    # Pure-JAX reference (matches torch: x * tanh(F.softplus(x))).
    return x * jnp.tanh(jax.nn.softplus(x))


if __name__ == "__main__":
    key = jax.random.PRNGKey(0)
    k1, k2 = jax.random.split(key)

    # Small shapes consistent with the model's usage:
    #  - (batch, out_size=32-ish, seq) like the conv activations Mish acts on
    #  - (batch, seq, hidden=768) exercising the lane-dense natural-layout path
    x_small = jax.random.normal(k1, (2, 8, 32), dtype=jnp.float32) * 3.0
    x_hidden = jax.random.normal(k2, (2, 9, 768), dtype=jnp.float32) * 3.0

    for x in (x_small, x_hidden):
        y = jax.block_until_ready(mish(x))
        y_ref = _mish_ref(x)
        assert y.shape == x.shape and y.dtype == x.dtype
        assert jnp.allclose(y, y_ref, atol=1e-5, rtol=1e-5), "mismatch vs reference"

    print("KERNEL_OK")
</pallas_src>

<mosaic_0001>
module attributes {stable_mosaic.version = 11 : i64} {
  func.func @_mish_kernel(%arg0: i32, %arg1: memref<1x512xf32, #tpu.memory_space<vmem>>, %arg2: memref<1x512xf32, #tpu.memory_space<vmem>>) attributes {dimension_semantics = [#tpu.dimension_semantics<parallel>], iteration_bounds = array<i64: 1>, scalar_prefetch = 0 : i64, scratch_operands = 0 : i64, tpu.core_type = #tpu.core_type<tc>, window_params = [{transform_indices = @transform_0, window_bounds = array<i64: 1, 512>}, {transform_indices = @transform_1, window_bounds = array<i64: 1, 512>}]} {
    %c0 = arith.constant 0 : index
    %c0_0 = arith.constant 0 : index
    %0 = vector.load %arg1[%c0, %c0_0] : memref<1x512xf32, #tpu.memory_space<vmem>>, vector<1x512xf32>
    %cst = arith.constant 2.000000e+01 : f32
    %1 = vector.broadcast %cst : f32 to vector<1x512xf32>
    %2 = arith.minimumf %0, %1 : vector<1x512xf32>
    %3 = math.exp %2 : vector<1x512xf32>
    %cst_1 = arith.constant 2.000000e+00 : f32
    %4 = vector.broadcast %cst_1 : f32 to vector<1x512xf32>
    %5 = arith.addf %3, %4 : vector<1x512xf32>
    %6 = arith.mulf %3, %5 : vector<1x512xf32>
    %cst_2 = arith.constant 2.000000e+00 : f32
    %7 = vector.broadcast %cst_2 : f32 to vector<1x512xf32>
    %8 = arith.addf %6, %7 : vector<1x512xf32>
    %9 = arith.divf %6, %8 : vector<1x512xf32>
    %10 = arith.mulf %0, %9 : vector<1x512xf32>
    %c0_3 = arith.constant 0 : index
    %c0_4 = arith.constant 0 : index
    %11 = vector.load %arg2[%c0_3, %c0_4] : memref<1x512xf32, #tpu.memory_space<vmem>>, vector<1x512xf32>
    tpu.vector_store %arg2[%c0_3, %c0_4], %10 {strides = array<i32>} : memref<1x512xf32, #tpu.memory_space<vmem>>, vector<1x512xf32>,
    return
  }
  func.func @transform_0(%arg0: i32) -> (i32, i32) {
    %c0_i32 = arith.constant 0 : i32
    %c0_i32_0 = arith.constant 0 : i32
    return %arg0, %c0_i32 : i32, i32
  }
  func.func @transform_1(%arg0: i32) -> (i32, i32) {
    %c0_i32 = arith.constant 0 : i32
    %c0_i32_0 = arith.constant 0 : i32
    return %arg0, %c0_i32 : i32, i32
  }
}

</mosaic_0001>

<llo_original>
// kernel: tpu_custom_call.1
$region0: #{tpu_custom_call.1}
  #allocation0 [shape = 'u32[]', space=smem, size = 0x4, offset = 0x4, fixed_abs, tag = 'smem constant byte address 0x4 - core index']
  #allocation1 [shape = 'u32[144,128]{1,0:T(1,128)}', space=vmem, size = 0x12000, scoped, tag = 'internal scratch']
  %s0 = inlined_call_operand.hbm [shape: f32[1,512], index: 0, kind: input, shape index: {}]
  %s1 = inlined_call_operand.hbm [shape: f32[1,512], index: 1, kind: output, shape index: {}]
  %s2 = sld [smem:[#allocation0]]
  $region18: #{tpu_custom_call.1} parent=0
    _
  %s4 = ssub.s32 1, %s2
  %s5 = scalar_select 0, %s4, %s2
  $region1: #{tpu_custom_call.1} parent=0
    #allocation2 [shape = 'u8[2048]{0}', space=vmem, size = 0x800, scoped, tag = 'input window, operand 0, single buffered']
    #allocation3 [shape = 's32[1]{0}', space=sflag, size = 0x4, scoped, tag = 'scoped memory for tpu_custom_call.1']
    #allocation4 [shape = 's32[1]{0}', space=sflag, size = 0x4, scoped, tag = 'scoped memory for tpu_custom_call.1']
    #allocation5 [shape = 'u8[2048]{0}', space=vmem, size = 0x800, scoped, tag = 'output window, operand 0, single buffered']
    %6 = vsyncpa [#allocation3], 0
    %7 = vsyncpa [#allocation4], 0
    // Predicated region
    $region2: #{tpu_custom_call.1} parent=1 // pred_check
      _
    $region3: #{tpu_custom_call.1} parent=1 // pred_check_branch
      %9 = sbr.rel (0) target = $region5
    $region4: #{tpu_custom_call.1} parent=1 // pred_region
      %s11 = ssub.s32 64, 64
      %12 = vsyncadd [#allocation3], %s11
      %s14 = sshll.u32 [#allocation2], 4
      %s15 = int_to_ptr.vmem [resolvable:$true] %s14
      %17 = dma.hbm_to_vmem [thread:$0]  %s0, 64, %s15, [#allocation3]
    $region5: #{tpu_custom_call.1} parent=1 // pred_fallthru
      _
    // Predicated region
    $region6: #{tpu_custom_call.1} parent=1 // pred_check
      _
    $region7: #{tpu_custom_call.1} parent=1 // pred_check_branch
      %19 = sbr.rel (0) target = $region9
    $region8: #{tpu_custom_call.1} parent=1 // pred_region
      %20 = dma.done [#allocation3], 64
    $region9: #{tpu_custom_call.1} parent=1 // pred_fallthru
      _
    %v21 = vld [vmem:[#allocation2] sm:$0xf]
    %v22 = vmin.f32 %v21, 20.0
    %v23 = vmul.f32 %v22, 1.442695
    %v24 = vpow.pop %v23
    %v25 = vadd.f32 %v24, 2.0
    %v26 = vmul.f32 %v24, %v25
    %v27 = vadd.f32 %v26, 2.0
    %v28 = vrcp.pop %v27
    %v29 = vmul.f32 %v26, %v28
    %v30 = vmul.f32 %v21, %v29
    %v31 = vlaneseq
    %vm32 = vcmp.ge.s32.totalorder %v31, 0
    %vm33 = vcmp.lt.s32.totalorder %v31, 512
    %vm34 = vmand %vm32, %vm33
    %35 = vst.msk [vmem:[#allocation5] sm:$0xf] %vm34, %v30
    // Predicated region
    $region10: #{tpu_custom_call.1} parent=1 // pred_check
      _
    $region11: #{tpu_custom_call.1} parent=1 // pred_check_branch
      %37 = sbr.rel (0) target = $region13
    $region12: #{tpu_custom_call.1} parent=1 // pred_region
      %s39 = ssub.s32 64, 64
      %40 = vsyncadd [#allocation4], %s39
      %s42 = sshll.u32 [#allocation5], 4
      %s43 = int_to_ptr.vmem [resolvable:$true] %s42
      %45 = dma.vmem_to_hbm [thread:$0]  %s43, 64, %s1, [#allocation4]
    $region13: #{tpu_custom_call.1} parent=1 // pred_fallthru
      _
    // Predicated region
    $region14: #{tpu_custom_call.1} parent=1 // pred_check
      _
    $region15: #{tpu_custom_call.1} parent=1 // pred_check_branch
      %47 = sbr.rel (0) target = $region17
    $region16: #{tpu_custom_call.1} parent=1 // pred_region
      %48 = dma.done [#allocation4], 64
    $region17: #{tpu_custom_call.1} parent=1 // pred_fallthru
      _
    %49 = vsyncpa [#allocation3], 1
    %50 = vsyncpa [#allocation4], 1

</llo_original>
